<compile_context>
chip_gen: v7x
topology: tpu7x:2x2x1
jax: 0.10.0
libtpu: 0.0.40
codegen_flags: <defaults>
</compile_context>

<pallas_src>
import functools

import jax
import jax.numpy as jnp
from jax.experimental import pallas as pl
from jax.experimental.pallas import tpu as pltpu


def _cdiv(a, b):
    return (a + b - 1) // b


def _round_up(n, m):
    return _cdiv(n, m) * m


def _act_kernel(*refs, deterministic, has_avail):
    if has_avail:
        seed_ref, x_ref, wT_ref, b_ref, availT_ref, act_ref, logp_ref = refs
    else:
        seed_ref, x_ref, wT_ref, b_ref, act_ref, logp_ref = refs
        availT_ref = None

    # logits^T [A, TB] = W^T [A, D] . x [TB, D] contracted over D (f32 accum).
    logits = jax.lax.dot_general(
        wT_ref[...], x_ref[...],
        dimension_numbers=(((1,), (1,)), ((), ())),
        preferred_element_type=jnp.float32,
    ) + b_ref[...]

    if has_avail:
        # Categorical convention: logits[avail == 0] = -1e10.
        logits = jnp.where(availT_ref[...] != 0, logits, jnp.float32(-1e10))

    A, TB = logits.shape
    row = jax.lax.broadcasted_iota(jnp.int32, (A, TB), 0)

    # Numerically stable log-softmax pieces over the action (sublane) axis.
    m = jnp.max(logits, axis=0, keepdims=True)               # [1, TB]
    z = logits - m
    ez = jnp.exp(z)                                          # reused below
    lse = jnp.log(jnp.sum(ez, axis=0, keepdims=True))        # [1, TB]

    if deterministic:
        sel = logits                                         # mode
    else:
        # Portable in-kernel counter PRNG (int32 hash; no HBM noise tensor,
        # no pltpu.prng_* so it also runs in interpret mode).
        col = jax.lax.broadcasted_iota(jnp.int32, (A, TB), 1)
        gcol = pl.program_id(0) * TB + col                   # global batch col
        h = gcol * jnp.int32(A) + row                        # unique per element
        h = h + seed_ref[0] * jnp.int32(0x3504F333)          # per-call seed mix
        # Integer mixer; ((h >> 16) & 0xFFFF) == logical right shift by 16.
        for _ in range(2):
            h = (h ^ ((h >> 16) & jnp.int32(0xFFFF))) * jnp.int32(0x045D9F3B)
        h = h ^ ((h >> 16) & jnp.int32(0xFFFF))
        u24 = (h >> 8) & jnp.int32(0x00FFFFFF)               # 24 uniform bits
        u = (u24.astype(jnp.float32) + jnp.float32(0.5)) * jnp.float32(1.0 / (1 << 24))
        e = -jnp.log(u)                                      # Exp(1) noise
        # Exponential race: argmax_k p_k / E_k  ~  Categorical(p), reuses ez.
        sel = ez / e

    max_sel = jnp.max(sel, axis=0, keepdims=True)
    # Smallest index among ties == torch argmax convention.
    action = jnp.min(jnp.where(sel >= max_sel, row, jnp.int32(A)),
                     axis=0, keepdims=True)                  # [1, TB] int32

    if deterministic:
        logp = -lse                                          # chosen logit == m
    else:
        chosen_z = jnp.max(jnp.where(row == action, z, jnp.float32(-3e38)),
                           axis=0, keepdims=True)            # gather chosen z
        logp = chosen_z - lse

    act_ref[...] = action
    logp_ref[...] = logp


def _default_tile_b(B, D, itemsize):
    """Pick a lane-dense batch tile that fits comfortably in VMEM everywhere."""
    if B <= 512:
        return B                                  # single full-extent tile
    per_buf_budget = 16 << 20                     # one pipeline buffer of x
    cap = max(128, ((per_buf_budget // max(1, D * itemsize)) // 128) * 128)
    tile_b = min(2048, cap)
    if B <= tile_b:
        # v7x megacore: give the "parallel" grid axis at least 2 steps.
        tile_b = max(128, _round_up(_cdiv(B, 2), 128))
    return tile_b


def act_layer_forward(x, w, b, available_actions=None, deterministic=False,
                      seed=0, tile_b=None):
    """Discrete ACTLayer forward.

    x: [B, D] activations (natural layout, any float dtype)
    w: [D, A] Categorical linear weight, b: [A] bias
    Returns (actions [B,1] int32, action_log_probs [B,1] f32).
    """
    B, D = x.shape
    A = w.shape[1]
    has_avail = available_actions is not None

    itemsize = jnp.dtype(x.dtype).itemsize
    if tile_b is None:
        tile_b = _default_tile_b(B, D, itemsize)
    num_tiles = _cdiv(B, tile_b)

    wT = jnp.asarray(w).T.astype(x.dtype)                 # [A, D] (tiny)
    b2 = jnp.asarray(b).reshape(A, 1).astype(jnp.float32)  # [A, 1]
    seed_arr = jnp.asarray([seed], dtype=jnp.int32)

    in_specs = [
        pl.BlockSpec((tile_b, D), lambda i, s: (i, 0)),    # x tile [TB, D]
        pl.BlockSpec((A, D), lambda i, s: (0, 0)),         # W^T (resident)
        pl.BlockSpec((A, 1), lambda i, s: (0, 0)),         # bias (resident)
    ]
    args = [seed_arr, x, wT, b2]
    if has_avail:
        availT = (jnp.asarray(available_actions) > 0).astype(jnp.int8).T  # [A, B]
        in_specs.append(pl.BlockSpec((A, tile_b), lambda i, s: (0, i)))
        args.append(availT)

    kernel = functools.partial(_act_kernel,
                               deterministic=bool(deterministic),
                               has_avail=has_avail)

    grid_spec = pltpu.PrefetchScalarGridSpec(
        num_scalar_prefetch=1,
        grid=(num_tiles,),
        in_specs=in_specs,
        out_specs=(
            pl.BlockSpec((1, tile_b), lambda i, s: (0, i)),   # actions
            pl.BlockSpec((1, tile_b), lambda i, s: (0, i)),   # log-probs
        ),
    )

    # Derive the scoped-VMEM limit from the actual double-buffered footprint;
    # stays within v7x's 64 MiB/TC while letting v5e/v6e use big tiles.
    vmem_need = (2 * tile_b * D * itemsize
                 + 2 * A * D * itemsize
                 + 2 * A * 4
                 + (2 * tile_b * A if has_avail else 0)
                 + 2 * 2 * tile_b * 8)
    vmem_limit = int(min(max(vmem_need + (4 << 20), 32 << 20), 60 << 20))

    cost = pl.CostEstimate(
        flops=2 * B * D * A + 8 * B * A,
        transcendentals=B * A * (1 if deterministic else 2) + B,
        bytes_accessed=(B * D * itemsize + A * D * itemsize
                        + (B * A if has_avail else 0) + 2 * B * 4),
    )

    actions_t, logp_t = pl.pallas_call(
        kernel,
        out_shape=(
            jax.ShapeDtypeStruct((1, B), jnp.int32),
            jax.ShapeDtypeStruct((1, B), jnp.float32),
        ),
        grid_spec=grid_spec,
        compiler_params=pltpu.CompilerParams(
            dimension_semantics=("parallel",),
            vmem_limit_bytes=vmem_limit,
        ),
        cost_estimate=cost,
    )(*args)

    return actions_t.reshape(B, 1), logp_t.reshape(B, 1)


def init_categorical_params(key, inputs_dim, action_dim, gain=0.01):
    """Orthogonal init (gain-scaled) + zero bias, as in Categorical."""
    a = jax.random.normal(key, (inputs_dim, action_dim), dtype=jnp.float32)
    q, r = jnp.linalg.qr(a)
    q = q * jnp.sign(jnp.diag(r))
    w = gain * q[:, :action_dim]
    b = jnp.zeros((action_dim,), dtype=jnp.float32)
    return w, b


if __name__ == "__main__":
    key = jax.random.PRNGKey(0)
    k_x, k_w, k_avail = jax.random.split(key, 3)

    B, D, A = 8, 32, 6                     # batch, inputs_dim, Discrete(6)

    x = jax.random.normal(k_x, (B, D), dtype=jnp.float32)
    w, b = init_categorical_params(k_w, D, A, gain=0.01)

    # Some actions unavailable; guarantee at least one available per row.
    avail = (jax.random.uniform(k_avail, (B, A)) > 0.3).astype(jnp.float32)
    avail = avail.at[:, 0].set(1.0)

    # deterministic (mode) path with mask
    actions_det, logp_det = act_layer_forward(
        x, w, b, available_actions=avail, deterministic=True)
    # stochastic (sample) path via in-kernel exponential-race sampling
    actions_smp, logp_smp = act_layer_forward(
        x, w, b, available_actions=avail, deterministic=False, seed=1234)
    # no-mask static fast path (deterministic)
    actions_nm, logp_nm = act_layer_forward(x, w, b, deterministic=True)

    jax.block_until_ready(
        (actions_det, logp_det, actions_smp, logp_smp, actions_nm, logp_nm))

    # plain-JAX reference
    logits_raw = x @ w + b
    logits_msk = jnp.where(avail > 0, logits_raw, -1e10)
    logp_msk = jax.nn.log_softmax(logits_msk, axis=-1)
    logp_raw = jax.nn.log_softmax(logits_raw, axis=-1)

    assert actions_det.shape == (B, 1) and actions_det.dtype == jnp.int32
    assert logp_det.shape == (B, 1) and logp_det.dtype == jnp.float32

    # deterministic + mask: chosen action attains the max masked logit and its
    # log-prob matches the reference log-softmax gather.
    chosen_logit = jnp.take_along_axis(logits_msk, actions_det, axis=-1)
    assert bool(jnp.allclose(chosen_logit,
                             jnp.max(logits_msk, axis=-1, keepdims=True),
                             atol=1e-4))
    assert bool(jnp.allclose(
        logp_det, jnp.take_along_axis(logp_msk, actions_det, axis=-1), atol=2e-3))

    # deterministic, no mask: same checks against the unmasked distribution.
    chosen_nm = jnp.take_along_axis(logits_raw, actions_nm, axis=-1)
    assert bool(jnp.allclose(chosen_nm,
                             jnp.max(logits_raw, axis=-1, keepdims=True),
                             atol=1e-4))
    assert bool(jnp.allclose(
        logp_nm, jnp.take_along_axis(logp_raw, actions_nm, axis=-1), atol=2e-3))

    # stochastic: sampled actions must be available and the reported log-prob
    # must be the (noise-free) Categorical log-prob of that action.
    assert bool(jnp.all(jnp.take_along_axis(avail, actions_smp, axis=-1) > 0))
    assert bool(jnp.allclose(
        logp_smp, jnp.take_along_axis(logp_msk, actions_smp, axis=-1), atol=2e-3))

    print("KERNEL_OK")
</pallas_src>

<mosaic_0001>
module attributes {stable_mosaic.version = 11 : i64} {
  func.func @_act_kernel(%arg0: i32, %arg1: memref<1xi32, #tpu.memory_space<smem>>, %arg2: memref<8x32xf32, #tpu.memory_space<vmem>>, %arg3: memref<6x32xf32, #tpu.memory_space<vmem>>, %arg4: memref<6x1xf32, #tpu.memory_space<vmem>>, %arg5: memref<6x8xi8, #tpu.memory_space<vmem>>, %arg6: memref<1x8xi32, #tpu.memory_space<vmem>>, %arg7: memref<1x8xf32, #tpu.memory_space<vmem>>) attributes {dimension_semantics = [#tpu.dimension_semantics<parallel>], iteration_bounds = array<i64: 1>, scalar_prefetch = 1 : i64, scratch_operands = 0 : i64, tpu.core_type = #tpu.core_type<tc>, window_params = [{transform_indices = @transform_0, window_bounds = array<i64: 8, 32>}, {pipeline_mode = #tpu.pipeline_mode<synchronous>, transform_indices = @transform_1, window_bounds = array<i64: 6, 32>}, {pipeline_mode = #tpu.pipeline_mode<synchronous>, transform_indices = @transform_2, window_bounds = array<i64: 6, 1>}, {transform_indices = @transform_3, window_bounds = array<i64: 6, 8>}, {transform_indices = @transform_4, window_bounds = array<i64: 1, 8>}, {transform_indices = @transform_5, window_bounds = array<i64: 1, 8>}]} {
    %c0 = arith.constant 0 : index
    %c0_0 = arith.constant 0 : index
    %0 = vector.load %arg3[%c0, %c0_0] : memref<6x32xf32, #tpu.memory_space<vmem>>, vector<6x32xf32>
    %c0_1 = arith.constant 0 : index
    %c0_2 = arith.constant 0 : index
    %1 = vector.load %arg2[%c0_1, %c0_2] : memref<8x32xf32, #tpu.memory_space<vmem>>, vector<8x32xf32>
    %cst = arith.constant dense<0.000000e+00> : vector<6x8xf32>
    %2 = tpu.matmul %0, %1, %cst {dimension_numbers = #tpu.dot_dimension_numbers<[1], [1], [0], [0], [0, 0, 1, 0], [], []>} : vector<6x32xf32>, vector<8x32xf32>, vector<6x8xf32> -> vector<6x8xf32>
    %c0_3 = arith.constant 0 : index
    %c0_4 = arith.constant 0 : index
    %3 = vector.load %arg4[%c0_3, %c0_4] : memref<6x1xf32, #tpu.memory_space<vmem>>, vector<6x1xf32>
    %4 = vector.broadcast %3 : vector<6x1xf32> to vector<6x8xf32>
    %5 = arith.addf %2, %4 : vector<6x8xf32>
    %c0_5 = arith.constant 0 : index
    %c0_6 = arith.constant 0 : index
    %6 = vector.load %arg5[%c0_5, %c0_6] : memref<6x8xi8, #tpu.memory_space<vmem>>, vector<6x8xi8>
    %c0_i8 = arith.constant 0 : i8
    %7 = vector.broadcast %c0_i8 : i8 to vector<6x8xi8>
    %8 = arith.cmpi ne, %6, %7 : vector<6x8xi8>
    %cst_7 = arith.constant -1.000000e+10 : f32
    %9 = vector.broadcast %cst_7 : f32 to vector<6x8xf32>
    %10 = arith.select %8, %5, %9 : vector<6x8xi1>, vector<6x8xf32>
    %11 = tpu.iota {dimensions = array<i32: 0>} : vector<6x8xi32>
    %cst_8 = arith.constant dense<0xFF800000> : vector<8xf32>
    %12 = vector.multi_reduction <maximumf>, %10, %cst_8 [0] : vector<6x8xf32> to vector<8xf32>
    %13 = vector.shape_cast %12 : vector<8xf32> to vector<1x8xf32>
    %14 = vector.broadcast %13 : vector<1x8xf32> to vector<6x8xf32>
    %15 = arith.subf %10, %14 : vector<6x8xf32>
    %16 = math.exp %15 : vector<6x8xf32>
    %cst_9 = arith.constant dense<0.000000e+00> : vector<8xf32>
    %17 = vector.multi_reduction <add>, %16, %cst_9 [0] : vector<6x8xf32> to vector<8xf32>
    %18 = vector.shape_cast %17 : vector<8xf32> to vector<1x8xf32>
    %19 = math.log %18 : vector<1x8xf32>
    %cst_10 = arith.constant dense<0xFF800000> : vector<8xf32>
    %20 = vector.multi_reduction <maximumf>, %10, %cst_10 [0] : vector<6x8xf32> to vector<8xf32>
    %21 = vector.shape_cast %20 : vector<8xf32> to vector<1x8xf32>
    %22 = vector.broadcast %21 : vector<1x8xf32> to vector<6x8xf32>
    %23 = arith.cmpf oge, %10, %22 : vector<6x8xf32>
    %c6_i32 = arith.constant 6 : i32
    %24 = vector.broadcast %c6_i32 : i32 to vector<6x8xi32>
    %25 = arith.select %23, %11, %24 : vector<6x8xi1>, vector<6x8xi32>
    %cst_11 = arith.constant dense<2147483647> : vector<8xi32>
    %26 = vector.multi_reduction <minsi>, %25, %cst_11 [0] : vector<6x8xi32> to vector<8xi32>
    %27 = vector.shape_cast %26 : vector<8xi32> to vector<1x8xi32>
    %cst_12 = arith.constant 0.000000e+00 : f32
    %28 = vector.broadcast %cst_12 : f32 to vector<1x8xf32>
    %29 = arith.subf %28, %19 : vector<1x8xf32>
    %c0_13 = arith.constant 0 : index
    %c0_14 = arith.constant 0 : index
    %30 = vector.load %arg6[%c0_13, %c0_14] : memref<1x8xi32, #tpu.memory_space<vmem>>, vector<1x8xi32>
    tpu.vector_store %arg6[%c0_13, %c0_14], %27 {strides = array<i32>} : memref<1x8xi32, #tpu.memory_space<vmem>>, vector<1x8xi32>,
    %c0_15 = arith.constant 0 : index
    %c0_16 = arith.constant 0 : index
    %31 = vector.load %arg7[%c0_15, %c0_16] : memref<1x8xf32, #tpu.memory_space<vmem>>, vector<1x8xf32>
    tpu.vector_store %arg7[%c0_15, %c0_16], %29 {strides = array<i32>} : memref<1x8xf32, #tpu.memory_space<vmem>>, vector<1x8xf32>,
    return
  }
  func.func @transform_0(%arg0: i32, %arg1: memref<1xi32, #tpu.memory_space<smem>>) -> (i32, i32) {
    %c0_i32 = arith.constant 0 : i32
    %c0_i32_0 = arith.constant 0 : i32
    return %arg0, %c0_i32 : i32, i32
  }
  func.func @transform_1(%arg0: i32, %arg1: memref<1xi32, #tpu.memory_space<smem>>) -> (i32, i32) {
    %c0_i32 = arith.constant 0 : i32
    %c0_i32_0 = arith.constant 0 : i32
    %c0_i32_1 = arith.constant 0 : i32
    return %c0_i32, %c0_i32_0 : i32, i32
  }
  func.func @transform_2(%arg0: i32, %arg1: memref<1xi32, #tpu.memory_space<smem>>) -> (i32, i32) {
    %c0_i32 = arith.constant 0 : i32
    %c0_i32_0 = arith.constant 0 : i32
    %c0_i32_1 = arith.constant 0 : i32
    return %c0_i32, %c0_i32_0 : i32, i32
  }
  func.func @transform_3(%arg0: i32, %arg1: memref<1xi32, #tpu.memory_space<smem>>) -> (i32, i32) {
    %c0_i32 = arith.constant 0 : i32
    %c0_i32_0 = arith.constant 0 : i32
    return %c0_i32, %arg0 : i32, i32
  }
  func.func @transform_4(%arg0: i32, %arg1: memref<1xi32, #tpu.memory_space<smem>>) -> (i32, i32) {
    %c0_i32 = arith.constant 0 : i32
    %c0_i32_0 = arith.constant 0 : i32
    return %c0_i32, %arg0 : i32, i32
  }
  func.func @transform_5(%arg0: i32, %arg1: memref<1xi32, #tpu.memory_space<smem>>) -> (i32, i32) {
    %c0_i32 = arith.constant 0 : i32
    %c0_i32_0 = arith.constant 0 : i32
    return %c0_i32, %arg0 : i32, i32
  }
}

</mosaic_0001>

<llo_original>
// kernel: tpu_custom_call.1
$region0: #{tpu_custom_call.1}
  #allocation0 [shape = 'u32[]', space=smem, size = 0x4, offset = 0x4, fixed_abs, tag = 'smem constant byte address 0x4 - core index']
  #allocation1 [shape = 'u32[144,128]{1,0:T(1,128)}', space=vmem, size = 0x12000, scoped, tag = 'internal scratch']
  #allocation2 [shape = 's32[1]{0}', space=sflag, size = 0x4, scoped, tag = 'scoped memory for tpu_custom_call.1']
  #allocation3 [shape = 's32[1]{0:T(128)S(6)}', space=smem, size = 0x200, scoped, tag = 'prefetched SMEM operand 0']
  %s0 = inlined_call_operand.<no memory space> [shape: s32[1], index: 0, kind: input, shape index: {}]
  %s1 = inlined_call_operand.vmem [shape: f32[8,32], index: 1, kind: input, shape index: {}]
  %s2 = inlined_call_operand.vmem [shape: f32[6,32], index: 2, kind: input, shape index: {}]
  %s3 = inlined_call_operand.vmem [shape: f32[6,1], index: 3, kind: input, shape index: {}]
  %s4 = inlined_call_operand.vmem [shape: s8[6,8], index: 4, kind: input, shape index: {}]
  %s5 = inlined_call_operand.hbm [shape: s32[1,8], index: 5, kind: output, shape index: {0}]
  %s6 = inlined_call_operand.hbm [shape: f32[1,8], index: 6, kind: output, shape index: {1}]
  %7 = xla_tuple %s5, %s6
  %s8 = sld [smem:[#allocation0]]
  $region34: #{tpu_custom_call.1} parent=0
    _
  %s10 = ssub.s32 1, %s8
  %s11 = scalar_select 0, %s10, %s8
  %12 = sst [smem:[#allocation3]] %s0
  $region1: #{tpu_custom_call.1} parent=0
    #allocation4 [shape = 'u8[512]{0}', space=vmem, size = 0x400, scoped, tag = 'output window, operand 0, single buffered']
    #allocation5 [shape = 's32[1]{0}', space=sflag, size = 0x4, scoped, tag = 'scoped memory for tpu_custom_call.1']
    #allocation6 [shape = 'u8[512]{0}', space=vmem, size = 0x400, scoped, tag = 'output window, operand 1, single buffered']
    #allocation7 [shape = 's32[1]{0}', space=sflag, size = 0x4, scoped, tag = 'scoped memory for tpu_custom_call.1']
    %13 = vsyncpa [#allocation5], 0
    %14 = vsyncpa [#allocation7], 0
    // Predicated region
    $region2: #{tpu_custom_call.1} parent=1 // pred_check
      _
    $region3: #{tpu_custom_call.1} parent=1 // pred_check_branch
      %16 = sbr.rel (0) target = $region5
    $region4: #{tpu_custom_call.1} parent=1 // pred_region
      _
    $region5: #{tpu_custom_call.1} parent=1 // pred_fallthru
      _
    // Predicated region
    $region6: #{tpu_custom_call.1} parent=1 // pred_check
      _
    $region7: #{tpu_custom_call.1} parent=1 // pred_check_branch
      %18 = sbr.rel (0) target = $region9
    $region8: #{tpu_custom_call.1} parent=1 // pred_region
      _
    $region9: #{tpu_custom_call.1} parent=1 // pred_fallthru
      _
    // Predicated region
    $region10: #{tpu_custom_call.1} parent=1 // pred_check
      _
    $region11: #{tpu_custom_call.1} parent=1 // pred_check_branch
      %20 = sbr.rel (0) target = $region13
    $region12: #{tpu_custom_call.1} parent=1 // pred_region
      _
    $region13: #{tpu_custom_call.1} parent=1 // pred_fallthru
      _
    // Predicated region
    $region14: #{tpu_custom_call.1} parent=1 // pred_check
      _
    $region15: #{tpu_custom_call.1} parent=1 // pred_check_branch
      %22 = sbr.rel (0) target = $region17
    $region16: #{tpu_custom_call.1} parent=1 // pred_region
      _
    $region17: #{tpu_custom_call.1} parent=1 // pred_fallthru
      _
    %v25 = vld [vmem:[%s2] sm:$0x3f]
    %v26 = vld [vmem:[%s1] sm:$0xff]
    %v27 = vld [vmem:[%s3] sm:$0x3f]
    %29 = vset.pattern.permute.xlu0 0
    %30 = vperm.xlu0 %29, %v27
    %v31 = vpop.permute.xlu0 %30
    %vm33 = vcmask 261120
    %v35 = vsel %vm33, %v25, 0
    %v38 = vsel %vm33, %v26, 0
    %40 = vmatprep.subr.mxu0 0.0
    %41 = vmatpush1.xpose.msra.mxu0 %v38
    %42 = vmatprep.subr.mxu0 0.0
    %43 = vmatpush1.xpose.msra.mxu0 0.0
    %44 = vmatprep.subr.mxu0 0.0
    %45 = vmatpush1.xpose.msra.mxu0 0.0
    %46 = vmatprep.subr.mxu0 0.0
    %47 = vmatpush1.xpose.msra.mxu0 0.0
    %48 = vmatprep.subr.mxu0 0.0
    %49 = vmatpush1.xpose.msra.mxu0 0.0
    %50 = vmatprep.subr.mxu0 0.0
    %51 = vmatpush1.xpose.msra.mxu0 0.0
    %52 = vmatprep.subr.mxu0 0.0
    %53 = vmatpush1.xpose.msra.mxu0 0.0
    %54 = vmatprep.subr.mxu0 0.0
    %55 = vmatpush1.xpose.msra.mxu0 0.0
    %56 = vmatprep.subr.mxu0 0.0
    %57 = vmatpush1.xpose.msra.mxu0 0.0
    %58 = vmatprep.subr.mxu0 0.0
    %59 = vmatpush1.xpose.msra.mxu0 0.0
    %60 = vmatprep.subr.mxu0 0.0
    %61 = vmatpush1.xpose.msra.mxu0 0.0
    %62 = vmatprep.subr.mxu0 0.0
    %63 = vmatpush1.xpose.msra.mxu0 0.0
    %64 = vmatprep.subr.mxu0 0.0
    %65 = vmatpush1.xpose.msra.mxu0 0.0
    %66 = vmatprep.subr.mxu0 0.0
    %67 = vmatpush1.xpose.msra.mxu0 0.0
    %68 = vmatprep.subr.mxu0 0.0
    %69 = vmatpush1.xpose.msra.mxu0 0.0
    %70 = vmatprep.subr.mxu0 0.0
    %71 = vmatpush1.xpose.msra.mxu0 0.0
    %72 = vmatprep.subr.mxu0 0.0
    %73 = vmatpush1.xpose.msra.mxu0 0.0
    %74 = vmatprep.subr.mxu0 0.0
    %75 = vmatpush1.xpose.msra.mxu0 0.0
    %76 = vmatprep.subr.mxu0 0.0
    %77 = vmatpush1.xpose.msra.mxu0 0.0
    %78 = vmatprep.subr.mxu0 0.0
    %79 = vmatpush1.xpose.msra.mxu0 0.0
    %80 = vmatprep.subr.mxu0 0.0
    %81 = vmatpush1.xpose.msra.mxu0 0.0
    %82 = vmatprep.subr.mxu0 0.0
    %83 = vmatpush1.xpose.msra.mxu0 0.0
    %84 = vmatprep.subr.mxu0 0.0
    %85 = vmatpush1.xpose.msra.mxu0 0.0
    %86 = vmatprep.subr.mxu0 0.0
    %87 = vmatpush1.xpose.msra.mxu0 0.0
    %88 = vmatprep.subr.mxu0 0.0
    %89 = vmatpush1.xpose.msra.mxu0 0.0
    %90 = vmatprep.subr.mxu0 0.0
    %91 = vmatpush1.xpose.msra.mxu0 0.0
    %92 = vmatprep.subr.mxu0 0.0
    %93 = vmatpush1.xpose.msra.mxu0 0.0
    %94 = vmatprep.subr.mxu0 0.0
    %95 = vmatpush1.xpose.msra.mxu0 0.0
    %96 = vmatprep.subr.mxu0 0.0
    %97 = vmatpush1.xpose.msra.mxu0 0.0
    %98 = vmatprep.subr.mxu0 0.0
    %99 = vmatpush1.xpose.msra.mxu0 0.0
    %100 = vmatprep.subr.mxu0 0.0
    %101 = vmatpush1.xpose.msra.mxu0 0.0
    %102 = vmatprep.subr.mxu0 0.0
    %103 = vmatpush1.xpose.msra.mxu0 0.0
    %104 = vmatprep.mubr.f32.mxu0 0.0
    %105 = vmatmul.mubr.f32.gmra.mrb[0].mxu0 %v35
    %v106 = vpop.f32.mrb[0].mxu0
    %v107 = vadd.f32 %v31, %v106
    %v108 = vpop.f32.mrb[0].mxu0
    %109 = vdwg.mxu0
    %v110 = vld [vmem:[%s4] sm:$0x3]
    %vm111 = vnez %v110
    %v112 = vsel %vm111, 16843009, 0
    %v113 = vunpack.c.0.s8 %v112
    %vm114 = vcmp.ne.s32.totalorder %v113, 0
    %v115 = vsel %vm114, %v107, -1e+10
    %v116 = vlaneseq
    %v117 = vshrl.u32 %v116, 7
    %vm118 = vcmask 62464
    %v119 = vsel %vm118, %v115, -inf
    %v120 = vrot.slane %v119, 4
    %v121 = vmax.f32 %v119, %v120
    %v122 = vrot.slane %v121, 2
    %v123 = vmax.f32 %v121, %v122
    %v124 = vrot.slane %v123, 1
    %v125 = vmax.f32 %v123, %v124
    %v126 = vsub.f32 %v115, %v125
    %v127 = vmul.f32 %v126, 1.442695
    %v128 = vpow.pop %v127
    %v129 = vsel %vm118, %v128, 0.0
    %v130 = vrot.slane %v129, 4
    %v131 = vadd.f32 %v129, %v130
    %v132 = vrot.slane %v131, 2
    %v133 = vadd.f32 %v131, %v132
    %v134 = vrot.slane %v133, 1
    %v135 = vadd.f32 %v133, %v134
    %v136 = vlog2.pop %v135
    %v137 = vmul.f32 %v136, 0.6931472
    %vm138 = vcmp.ge.f32.partialorder %v115, %v125
    %v139 = vsel %vm138, %v117, 6
    %v140 = vsel %vm118, %v139, 2147483647
    %v141 = vrot.slane %v140, 4
    %vm142 = vcmp.lt.s32.totalorder %v140, %v141
    %v143 = vsel %vm142, %v140, %v141
    %v144 = vrot.slane %v143, 2
    %vm145 = vcmp.lt.s32.totalorder %v143, %v144
    %v146 = vsel %vm145, %v143, %v144
    %v147 = vrot.slane %v146, 1
    %vm148 = vcmp.lt.s32.totalorder %v146, %v147
    %v149 = vsel %vm148, %v146, %v147
    %v150 = vsub.f32 0.0, %v137
    %vm151 = vcmask 57344
    %152 = vst.msk [vmem:[#allocation4] sm:$0x1] %vm151, %v149
    %153 = vst.msk [vmem:[#allocation6] sm:$0x1] %vm151, %v150
    // Predicated region
    $region18: #{tpu_custom_call.1} parent=1 // pred_check
      _
    $region19: #{tpu_custom_call.1} parent=1 // pred_check_branch
      %155 = sbr.rel (0) target = $region21
    $region20: #{tpu_custom_call.1} parent=1 // pred_region
      %s157 = ssub.s32 16, 16
      %158 = vsyncadd [#allocation5], %s157
      %s160 = sshll.u32 [#allocation4], 4
      %s161 = int_to_ptr.vmem [resolvable:$true] %s160
      %163 = dma.vmem_to_hbm [thread:$0]  %s161, 16, %s5, [#allocation5]
    $region21: #{tpu_custom_call.1} parent=1 // pred_fallthru
      _
    // Predicated region
    $region22: #{tpu_custom_call.1} parent=1 // pred_check
      _
    $region23: #{tpu_custom_call.1} parent=1 // pred_check_branch
      %165 = sbr.rel (0) target = $region25
    $region24: #{tpu_custom_call.1} parent=1 // pred_region
      %s167 = ssub.s32 16, 16
      %168 = vsyncadd [#allocation7], %s167
      %s170 = sshll.u32 [#allocation6], 4
      %s171 = int_to_ptr.vmem [resolvable:$true] %s170
      %173 = dma.vmem_to_hbm [thread:$0]  %s171, 16, %s6, [#allocation7]
    $region25: #{tpu_custom_call.1} parent=1 // pred_fallthru
      _
    // Predicated region
    $region26: #{tpu_custom_call.1} parent=1 // pred_check
      _
    $region27: #{tpu_custom_call.1} parent=1 // pred_check_branch
      %175 = sbr.rel (0) target = $region29
    $region28: #{tpu_custom_call.1} parent=1 // pred_region
      %176 = dma.done [#allocation5], 16
    $region29: #{tpu_custom_call.1} parent=1 // pred_fallthru
      _
    // Predicated region
    $region30: #{tpu_custom_call.1} parent=1 // pred_check
      _
    $region31: #{tpu_custom_call.1} parent=1 // pred_check_branch
      %178 = sbr.rel (0) target = $region33
    $region32: #{tpu_custom_call.1} parent=1 // pred_region
      %179 = dma.done [#allocation7], 16
    $region33: #{tpu_custom_call.1} parent=1 // pred_fallthru
      _
    %180 = vsyncpa [#allocation5], 1
    %181 = vsyncpa [#allocation7], 1

</llo_original>
